<compile_context>
chip_gen: v6e
topology: v6e:2x2x1
jax: 0.10.0
libtpu: 0.0.40
codegen_flags: <defaults>
</compile_context>

<pallas_src>
import jax
import jax.numpy as jnp
from jax.experimental import pallas as pl
from jax.experimental.pallas import tpu as pltpu


def _round_up(x, m):
    return ((x + m - 1) // m) * m


def _pad2(x, rows, cols):
    return jnp.pad(x, ((0, rows - x.shape[0]), (0, cols - x.shape[1])))


def mlp_classifier_kernel(tweet_ref, des_ref,
                          w1_ref, w2_ref, bh_ref,
                          wc_ref, bc_ref,
                          out_ref):
    # Collapsed hidden layer: h = tweet @ W1' + des @ W2' + bh'   (f32 acc)
    h = (jnp.dot(tweet_ref[...], w1_ref[...], preferred_element_type=jnp.float32)
         + jnp.dot(des_ref[...], w2_ref[...], preferred_element_type=jnp.float32)
         + bh_ref[...])

    # LeakyReLU (PyTorch default negative_slope = 0.01), in f32 on the VPU.
    h = jnp.where(h > 0, h, 0.01 * h)

    # Dropout: eval-mode identity.
    # TODO(synk): training-mode dropout would use pltpu.prng_seed/prng_random_bits.

    # Classifier into a lane-dense (TB, C_pad) output block.
    out_ref[...] = (jnp.dot(h.astype(wc_ref.dtype), wc_ref[...],
                            preferred_element_type=jnp.float32)
                    + bc_ref[...])


def mlp_classifier_forward(tweet, des, params, *,
                           block_b=512, compute_dtype=jnp.bfloat16):
    """tweet, des: (B, D) float32.  params: dict of (in, out)-layout weights."""
    B, D = tweet.shape
    H = params["bh"].shape[-1]
    C = params["bc"].shape[-1]
    Dh = D // 2

    # --- algebraic collapse of pre_model1/2 into the hidden matmul (f32, once) ---
    wh1 = params["wh"][:Dh, :]
    wh2 = params["wh"][Dh:, :]
    w1p = params["w1"] @ wh1                                      # (D, H)
    w2p = params["w2"] @ wh2                                      # (D, H)
    bhp = params["b1"] @ wh1 + params["b2"] @ wh2 + params["bh"]  # (1, H)

    # --- lane / batch padding ---
    D_pad = _round_up(D, 128)
    H_pad = _round_up(H, 128)
    C_pad = _round_up(C, 128)

    TB = _round_up(min(block_b, _round_up(B, 8)), 8)
    B_pad = _round_up(B, TB)
    grid = (B_pad // TB,)

    tweet_p = _pad2(tweet, B_pad, D_pad).astype(compute_dtype)
    des_p = _pad2(des, B_pad, D_pad).astype(compute_dtype)
    w1_p = _pad2(w1p, D_pad, H_pad).astype(compute_dtype)
    w2_p = _pad2(w2p, D_pad, H_pad).astype(compute_dtype)
    bh_p = _pad2(bhp, 1, H_pad).astype(jnp.float32)
    wc_p = _pad2(params["wc"], H_pad, C_pad).astype(compute_dtype)
    bc_p = _pad2(params["bc"], 1, C_pad).astype(jnp.float32)

    # Explicit VMEM budget (double-buffered streamed tiles + resident weights),
    # with margin, kept well under v7x's 64 MiB physical VMEM.
    cs = jnp.dtype(compute_dtype).itemsize
    vmem_est = (2 * (2 * TB * D_pad * cs)      # tweet + des tiles (dbl-buffered)
                + 2 * TB * C_pad * 4           # out tile (dbl-buffered)
                + 2 * (2 * D_pad * H_pad * cs  # collapsed hidden weights
                       + H_pad * C_pad * cs    # classifier weight
                       + (H_pad + C_pad) * 4)) # biases
    vmem_limit = int(min(max(2 * vmem_est, 16 * 1024 * 1024), 48 * 1024 * 1024))

    out = pl.pallas_call(
        mlp_classifier_kernel,
        out_shape=jax.ShapeDtypeStruct((B_pad, C_pad), jnp.float32),
        grid=grid,
        in_specs=[
            pl.BlockSpec((TB, D_pad), lambda i: (i, 0)),       # tweet tile
            pl.BlockSpec((TB, D_pad), lambda i: (i, 0)),       # des tile
            pl.BlockSpec((D_pad, H_pad), lambda i: (0, 0)),    # W1' (resident)
            pl.BlockSpec((D_pad, H_pad), lambda i: (0, 0)),    # W2' (resident)
            pl.BlockSpec((1, H_pad), lambda i: (0, 0)),        # bh' (resident)
            pl.BlockSpec((H_pad, C_pad), lambda i: (0, 0)),    # Wc  (resident)
            pl.BlockSpec((1, C_pad), lambda i: (0, 0)),        # bc  (resident)
        ],
        out_specs=pl.BlockSpec((TB, C_pad), lambda i: (i, 0)),
        compiler_params=pltpu.CompilerParams(
            dimension_semantics=("parallel",),
            vmem_limit_bytes=vmem_limit,
        ),
    )(tweet_p, des_p, w1_p, w2_p, bh_p, wc_p, bc_p)

    return out[:B, :C]


def init_params(key, input_dim, hidden_dim, output_size):
    """Deterministic synthetic parameters (transposed to (in, out) layout)."""
    ks = jax.random.split(key, 8)
    half = input_dim // 2
    s = 0.1
    return {
        "w1": s * jax.random.normal(ks[0], (input_dim, half), jnp.float32),
        "b1": s * jax.random.normal(ks[1], (1, half), jnp.float32),
        "w2": s * jax.random.normal(ks[2], (input_dim, half), jnp.float32),
        "b2": s * jax.random.normal(ks[3], (1, half), jnp.float32),
        "wh": s * jax.random.normal(ks[4], (input_dim, hidden_dim), jnp.float32),
        "bh": s * jax.random.normal(ks[5], (1, hidden_dim), jnp.float32),
        "wc": s * jax.random.normal(ks[6], (hidden_dim, output_size), jnp.float32),
        "bc": s * jax.random.normal(ks[7], (1, output_size), jnp.float32),
    }


def reference_forward(tweet, des, params):
    pre1 = tweet @ params["w1"] + params["b1"]
    pre2 = des @ params["w2"] + params["b2"]
    x = jnp.concatenate([pre1, pre2], axis=1)
    h = x @ params["wh"] + params["bh"]
    h = jnp.where(h > 0, h, 0.01 * h)
    return h @ params["wc"] + params["bc"]


if __name__ == "__main__":
    # Small shapes consistent with the module (input_dim even, as 728 is).
    B, D, H, C = 8, 32, 16, 2

    key = jax.random.PRNGKey(0)
    k_tweet, k_des, k_params = jax.random.split(key, 3)
    tweet = jax.random.normal(k_tweet, (B, D), jnp.float32)
    des = jax.random.normal(k_des, (B, D), jnp.float32)
    params = init_params(k_params, D, H, C)

    out = mlp_classifier_forward(tweet, des, params)
    out = jax.block_until_ready(out)

    ref = reference_forward(tweet, des, params)
    assert out.shape == (B, C)
    # bf16 streaming + f32 accumulation: relaxed tolerance vs f32 reference.
    assert jnp.allclose(out, ref, atol=2e-2, rtol=2e-2), "mismatch vs reference"

    print("KERNEL_OK")
</pallas_src>

<mosaic_0001>
module attributes {stable_mosaic.version = 11 : i64} {
  func.func @mlp_classifier_kernel(%arg0: i32, %arg1: memref<8x128xbf16, #tpu.memory_space<vmem>>, %arg2: memref<8x128xbf16, #tpu.memory_space<vmem>>, %arg3: memref<128x128xbf16, #tpu.memory_space<vmem>>, %arg4: memref<128x128xbf16, #tpu.memory_space<vmem>>, %arg5: memref<1x128xf32, #tpu.memory_space<vmem>>, %arg6: memref<128x128xbf16, #tpu.memory_space<vmem>>, %arg7: memref<1x128xf32, #tpu.memory_space<vmem>>, %arg8: memref<8x128xf32, #tpu.memory_space<vmem>>) attributes {dimension_semantics = [#tpu.dimension_semantics<parallel>], iteration_bounds = array<i64: 1>, scalar_prefetch = 0 : i64, scratch_operands = 0 : i64, tpu.core_type = #tpu.core_type<tc>, window_params = [{transform_indices = @transform_0, window_bounds = array<i64: 8, 128>}, {transform_indices = @transform_1, window_bounds = array<i64: 8, 128>}, {pipeline_mode = #tpu.pipeline_mode<synchronous>, transform_indices = @transform_2, window_bounds = array<i64: 128, 128>}, {pipeline_mode = #tpu.pipeline_mode<synchronous>, transform_indices = @transform_3, window_bounds = array<i64: 128, 128>}, {pipeline_mode = #tpu.pipeline_mode<synchronous>, transform_indices = @transform_4, window_bounds = array<i64: 1, 128>}, {pipeline_mode = #tpu.pipeline_mode<synchronous>, transform_indices = @transform_5, window_bounds = array<i64: 128, 128>}, {pipeline_mode = #tpu.pipeline_mode<synchronous>, transform_indices = @transform_6, window_bounds = array<i64: 1, 128>}, {transform_indices = @transform_7, window_bounds = array<i64: 8, 128>}]} {
    %c0 = arith.constant 0 : index
    %c0_0 = arith.constant 0 : index
    %0 = vector.load %arg1[%c0, %c0_0] : memref<8x128xbf16, #tpu.memory_space<vmem>>, vector<8x128xbf16>
    %c0_1 = arith.constant 0 : index
    %c0_2 = arith.constant 0 : index
    %1 = vector.load %arg3[%c0_1, %c0_2] : memref<128x128xbf16, #tpu.memory_space<vmem>>, vector<128x128xbf16>
    %cst = arith.constant dense<0.000000e+00> : vector<8x128xf32>
    %2 = tpu.matmul %0, %1, %cst {dimension_numbers = #tpu.dot_dimension_numbers<[1], [0], [0], [1], [0, 0, 1, 1], [], []>} : vector<8x128xbf16>, vector<128x128xbf16>, vector<8x128xf32> -> vector<8x128xf32>
    %c0_3 = arith.constant 0 : index
    %c0_4 = arith.constant 0 : index
    %3 = vector.load %arg2[%c0_3, %c0_4] : memref<8x128xbf16, #tpu.memory_space<vmem>>, vector<8x128xbf16>
    %c0_5 = arith.constant 0 : index
    %c0_6 = arith.constant 0 : index
    %4 = vector.load %arg4[%c0_5, %c0_6] : memref<128x128xbf16, #tpu.memory_space<vmem>>, vector<128x128xbf16>
    %cst_7 = arith.constant dense<0.000000e+00> : vector<8x128xf32>
    %5 = tpu.matmul %3, %4, %cst_7 {dimension_numbers = #tpu.dot_dimension_numbers<[1], [0], [0], [1], [0, 0, 1, 1], [], []>} : vector<8x128xbf16>, vector<128x128xbf16>, vector<8x128xf32> -> vector<8x128xf32>
    %6 = arith.addf %2, %5 : vector<8x128xf32>
    %c0_8 = arith.constant 0 : index
    %c0_9 = arith.constant 0 : index
    %7 = vector.load %arg5[%c0_8, %c0_9] : memref<1x128xf32, #tpu.memory_space<vmem>>, vector<1x128xf32>
    %8 = vector.broadcast %7 : vector<1x128xf32> to vector<8x128xf32>
    %9 = arith.addf %6, %8 : vector<8x128xf32>
    %cst_10 = arith.constant 0.000000e+00 : f32
    %10 = vector.broadcast %cst_10 : f32 to vector<8x128xf32>
    %11 = arith.cmpf ogt, %9, %10 : vector<8x128xf32>
    %cst_11 = arith.constant 0.00999999977 : f32
    %12 = vector.broadcast %cst_11 : f32 to vector<8x128xf32>
    %13 = arith.mulf %12, %9 : vector<8x128xf32>
    %14 = arith.select %11, %9, %13 : vector<8x128xi1>, vector<8x128xf32>
    %15 = arith.truncf %14 : vector<8x128xf32> to vector<8x128xbf16>
    %c0_12 = arith.constant 0 : index
    %c0_13 = arith.constant 0 : index
    %16 = vector.load %arg6[%c0_12, %c0_13] : memref<128x128xbf16, #tpu.memory_space<vmem>>, vector<128x128xbf16>
    %cst_14 = arith.constant dense<0.000000e+00> : vector<8x128xf32>
    %17 = tpu.matmul %15, %16, %cst_14 {dimension_numbers = #tpu.dot_dimension_numbers<[1], [0], [0], [1], [0, 0, 1, 1], [], []>} : vector<8x128xbf16>, vector<128x128xbf16>, vector<8x128xf32> -> vector<8x128xf32>
    %c0_15 = arith.constant 0 : index
    %c0_16 = arith.constant 0 : index
    %18 = vector.load %arg7[%c0_15, %c0_16] : memref<1x128xf32, #tpu.memory_space<vmem>>, vector<1x128xf32>
    %19 = vector.broadcast %18 : vector<1x128xf32> to vector<8x128xf32>
    %20 = arith.addf %17, %19 : vector<8x128xf32>
    %c0_17 = arith.constant 0 : index
    %c0_18 = arith.constant 0 : index
    %21 = vector.load %arg8[%c0_17, %c0_18] : memref<8x128xf32, #tpu.memory_space<vmem>>, vector<8x128xf32>
    tpu.vector_store %arg8[%c0_17, %c0_18], %20 {strides = array<i32>} : memref<8x128xf32, #tpu.memory_space<vmem>>, vector<8x128xf32>,
    return
  }
  func.func @transform_0(%arg0: i32) -> (i32, i32) {
    %c0_i32 = arith.constant 0 : i32
    %c0_i32_0 = arith.constant 0 : i32
    return %arg0, %c0_i32 : i32, i32
  }
  func.func @transform_1(%arg0: i32) -> (i32, i32) {
    %c0_i32 = arith.constant 0 : i32
    %c0_i32_0 = arith.constant 0 : i32
    return %arg0, %c0_i32 : i32, i32
  }
  func.func @transform_2(%arg0: i32) -> (i32, i32) {
    %c0_i32 = arith.constant 0 : i32
    %c0_i32_0 = arith.constant 0 : i32
    %c0_i32_1 = arith.constant 0 : i32
    return %c0_i32, %c0_i32_0 : i32, i32
  }
  func.func @transform_3(%arg0: i32) -> (i32, i32) {
    %c0_i32 = arith.constant 0 : i32
    %c0_i32_0 = arith.constant 0 : i32
    %c0_i32_1 = arith.constant 0 : i32
    return %c0_i32, %c0_i32_0 : i32, i32
  }
  func.func @transform_4(%arg0: i32) -> (i32, i32) {
    %c0_i32 = arith.constant 0 : i32
    %c0_i32_0 = arith.constant 0 : i32
    %c0_i32_1 = arith.constant 0 : i32
    return %c0_i32, %c0_i32_0 : i32, i32
  }
  func.func @transform_5(%arg0: i32) -> (i32, i32) {
    %c0_i32 = arith.constant 0 : i32
    %c0_i32_0 = arith.constant 0 : i32
    %c0_i32_1 = arith.constant 0 : i32
    return %c0_i32, %c0_i32_0 : i32, i32
  }
  func.func @transform_6(%arg0: i32) -> (i32, i32) {
    %c0_i32 = arith.constant 0 : i32
    %c0_i32_0 = arith.constant 0 : i32
    %c0_i32_1 = arith.constant 0 : i32
    return %c0_i32, %c0_i32_0 : i32, i32
  }
  func.func @transform_7(%arg0: i32) -> (i32, i32) {
    %c0_i32 = arith.constant 0 : i32
    %c0_i32_0 = arith.constant 0 : i32
    return %arg0, %c0_i32 : i32, i32
  }
}

</mosaic_0001>

<llo_original>
// kernel: tpu_custom_call.1
$region0: #{tpu_custom_call.1}
  #allocation0 [shape = 'u32[]', space=smem, size = 0x4, offset = 0x4, fixed_abs, tag = 'smem constant byte address 0x4 - core index']
  #allocation1 [shape = 'u32[144,128]{1,0:T(1,128)}', space=vmem, size = 0x12000, scoped, tag = 'internal scratch']
  %s0 = inlined_call_operand.hbm [shape: bf16[8,128], index: 0, kind: input, shape index: {}]
  %s1 = inlined_call_operand.hbm [shape: bf16[8,128], index: 1, kind: input, shape index: {}]
  %s2 = inlined_call_operand.hbm [shape: bf16[128,128], index: 2, kind: input, shape index: {}]
  %s3 = inlined_call_operand.hbm [shape: bf16[128,128], index: 3, kind: input, shape index: {}]
  %s4 = inlined_call_operand.vmem [shape: f32[1,128], index: 4, kind: input, shape index: {}]
  %s5 = inlined_call_operand.hbm [shape: bf16[128,128], index: 5, kind: input, shape index: {}]
  %s6 = inlined_call_operand.vmem [shape: f32[1,128], index: 6, kind: input, shape index: {}]
  %s7 = inlined_call_operand.hbm [shape: f32[8,128], index: 7, kind: output, shape index: {}]
  %s8 = sld [smem:[#allocation0]]
  $region58: #{tpu_custom_call.1} parent=0
    _
  %s10 = ssub.s32 1, %s8
  %s11 = scalar_select 0, %s10, %s8
  $region1: #{tpu_custom_call.1} parent=0
    #allocation2 [shape = 'u8[2048]{0}', space=vmem, size = 0x800, scoped, tag = 'input window, operand 0, single buffered']
    #allocation3 [shape = 's32[1]{0}', space=sflag, size = 0x4, scoped, tag = 'scoped memory for tpu_custom_call.1']
    #allocation4 [shape = 's32[1]{0}', space=sflag, size = 0x4, scoped, tag = 'scoped memory for tpu_custom_call.1']
    #allocation5 [shape = 'u8[2048]{0}', space=vmem, size = 0x800, scoped, tag = 'input window, operand 1, single buffered']
    #allocation6 [shape = 's32[1]{0}', space=sflag, size = 0x4, scoped, tag = 'scoped memory for tpu_custom_call.1']
    #allocation7 [shape = 'u8[32768]{0}', space=vmem, size = 0x8000, scoped, tag = 'input window, operand 2, single buffered']
    #allocation8 [shape = 'u8[32768]{0}', space=vmem, size = 0x8000, scoped, tag = 'input window, operand 3, single buffered']
    #allocation9 [shape = 's32[1]{0}', space=sflag, size = 0x4, scoped, tag = 'scoped memory for tpu_custom_call.1']
    #allocation10 [shape = 'u8[32768]{0}', space=vmem, size = 0x8000, scoped, tag = 'input window, operand 5, single buffered']
    #allocation11 [shape = 'u8[4096]{0}', space=vmem, size = 0x1000, scoped, tag = 'output window, operand 0, single buffered']
    %12 = vsyncpa [#allocation3], 0
    %13 = vsyncpa [#allocation6], 0
    %14 = vsyncpa [#allocation9], 0
    %15 = vsyncpa [#allocation4], 0
    // Predicated region
    $region2: #{tpu_custom_call.1} parent=1 // pred_check
      _
    $region3: #{tpu_custom_call.1} parent=1 // pred_check_branch
      %17 = sbr.rel (0) target = $region5
    $region4: #{tpu_custom_call.1} parent=1 // pred_region
      %s19 = ssub.s32 64, 64
      %20 = vsyncadd [#allocation3], %s19
      %s22 = sshll.u32 [#allocation2], 4
      %s23 = int_to_ptr.vmem [resolvable:$true] %s22
      %25 = dma.hbm_to_vmem [thread:$0]  %s0, 64, %s23, [#allocation3]
    $region5: #{tpu_custom_call.1} parent=1 // pred_fallthru
      _
    // Predicated region
    $region6: #{tpu_custom_call.1} parent=1 // pred_check
      _
    $region7: #{tpu_custom_call.1} parent=1 // pred_check_branch
      %27 = sbr.rel (0) target = $region9
    $region8: #{tpu_custom_call.1} parent=1 // pred_region
      %s29 = ssub.s32 64, 64
      %30 = vsyncadd [#allocation6], %s29
      %s32 = sshll.u32 [#allocation5], 4
      %s33 = int_to_ptr.vmem [resolvable:$true] %s32
      %35 = dma.hbm_to_vmem [thread:$0]  %s1, 64, %s33, [#allocation6]
    $region9: #{tpu_custom_call.1} parent=1 // pred_fallthru
      _
    // Predicated region
    $region10: #{tpu_custom_call.1} parent=1 // pred_check
      _
    $region11: #{tpu_custom_call.1} parent=1 // pred_check_branch
      %37 = sbr.rel (0) target = $region13
    $region12: #{tpu_custom_call.1} parent=1 // pred_region
      %s39 = ssub.s32 1024, 1024
      %40 = vsyncadd [#allocation6], %s39
      %s41 = sshll.u32 [#allocation7], 4
      %s42 = int_to_ptr.vmem [resolvable:$true] %s41
      %47 = dma.hbm_to_vmem [thread:$0]  %s2, 1024, %s42, [#allocation6], 64, 64, 4
    $region13: #{tpu_custom_call.1} parent=1 // pred_fallthru
      _
    // Predicated region
    $region14: #{tpu_custom_call.1} parent=1 // pred_check
      _
    $region15: #{tpu_custom_call.1} parent=1 // pred_check_branch
      %49 = sbr.rel (0) target = $region17
    $region16: #{tpu_custom_call.1} parent=1 // pred_region
      %s51 = ssub.s32 1024, 1024
      %52 = vsyncadd [#allocation9], %s51
      %s53 = sshll.u32 [#allocation8], 4
      %s54 = int_to_ptr.vmem [resolvable:$true] %s53
      %59 = dma.hbm_to_vmem [thread:$0]  %s3, 1024, %s54, [#allocation9], 64, 64, 4
    $region17: #{tpu_custom_call.1} parent=1 // pred_fallthru
      _
    // Predicated region
    $region18: #{tpu_custom_call.1} parent=1 // pred_check
      _
    $region19: #{tpu_custom_call.1} parent=1 // pred_check_branch
      %61 = sbr.rel (0) target = $region21
    $region20: #{tpu_custom_call.1} parent=1 // pred_region
      _
    $region21: #{tpu_custom_call.1} parent=1 // pred_fallthru
      _
    // Predicated region
    $region22: #{tpu_custom_call.1} parent=1 // pred_check
      _
    $region23: #{tpu_custom_call.1} parent=1 // pred_check_branch
      %63 = sbr.rel (0) target = $region25
    $region24: #{tpu_custom_call.1} parent=1 // pred_region
      %s65 = ssub.s32 1024, 1024
      %66 = vsyncadd [#allocation9], %s65
      %s67 = sshll.u32 [#allocation10], 4
      %s68 = int_to_ptr.vmem [resolvable:$true] %s67
      %73 = dma.hbm_to_vmem [thread:$0]  %s5, 1024, %s68, [#allocation9], 64, 64, 4
    $region25: #{tpu_custom_call.1} parent=1 // pred_fallthru
      _
    // Predicated region
    $region26: #{tpu_custom_call.1} parent=1 // pred_check
      _
    $region27: #{tpu_custom_call.1} parent=1 // pred_check_branch
      %75 = sbr.rel (0) target = $region29
    $region28: #{tpu_custom_call.1} parent=1 // pred_region
      _
    $region29: #{tpu_custom_call.1} parent=1 // pred_fallthru
      _
    // Predicated region
    $region30: #{tpu_custom_call.1} parent=1 // pred_check
      _
    $region31: #{tpu_custom_call.1} parent=1 // pred_check_branch
      %77 = sbr.rel (0) target = $region33
    $region32: #{tpu_custom_call.1} parent=1 // pred_region
      %78 = dma.done [#allocation3], 64
    $region33: #{tpu_custom_call.1} parent=1 // pred_fallthru
      _
    // Predicated region
    $region34: #{tpu_custom_call.1} parent=1 // pred_check
      _
    $region35: #{tpu_custom_call.1} parent=1 // pred_check_branch
      %80 = sbr.rel (0) target = $region37
    $region36: #{tpu_custom_call.1} parent=1 // pred_region
      %81 = dma.done [#allocation6], 64
    $region37: #{tpu_custom_call.1} parent=1 // pred_fallthru
      _
    // Predicated region
    $region38: #{tpu_custom_call.1} parent=1 // pred_check
      _
    $region39: #{tpu_custom_call.1} parent=1 // pred_check_branch
      %83 = sbr.rel (0) target = $region41
    $region40: #{tpu_custom_call.1} parent=1 // pred_region
      %84 = dma.done [#allocation6], 1024
    $region41: #{tpu_custom_call.1} parent=1 // pred_fallthru
      _
    // Predicated region
    $region42: #{tpu_custom_call.1} parent=1 // pred_check
      _
    $region43: #{tpu_custom_call.1} parent=1 // pred_check_branch
      %86 = sbr.rel (0) target = $region45
    $region44: #{tpu_custom_call.1} parent=1 // pred_region
      %87 = dma.done [#allocation9], 1024
    $region45: #{tpu_custom_call.1} parent=1 // pred_fallthru
      _
    // Predicated region
    $region46: #{tpu_custom_call.1} parent=1 // pred_check
      _
    $region47: #{tpu_custom_call.1} parent=1 // pred_check_branch
      %89 = sbr.rel (0) target = $region49
    $region48: #{tpu_custom_call.1} parent=1 // pred_region
      %90 = dma.done [#allocation9], 1024
    $region49: #{tpu_custom_call.1} parent=1 // pred_fallthru
      _
    %v92 = vld [vmem:[#allocation2] sm:$0xf]
    %v93 = vld [vmem:[#allocation7] sm:$0xf]
    %v94 = vld [vmem:[#allocation7 + $0x4] sm:$0xf]
    %v95 = vld [vmem:[#allocation7 + $0x8] sm:$0xf]
    %v96 = vld [vmem:[#allocation7 + $0xc] sm:$0xf]
    %v97 = vld [vmem:[#allocation7 + $0x10] sm:$0xf]
    %v98 = vld [vmem:[#allocation7 + $0x14] sm:$0xf]
    %v99 = vld [vmem:[#allocation7 + $0x18] sm:$0xf]
    %v100 = vld [vmem:[#allocation7 + $0x1c] sm:$0xf]
    %v101 = vld [vmem:[#allocation7 + $0x20] sm:$0xf]
    %v102 = vld [vmem:[#allocation7 + $0x24] sm:$0xf]
    %v103 = vld [vmem:[#allocation7 + $0x28] sm:$0xf]
    %v104 = vld [vmem:[#allocation7 + $0x2c] sm:$0xf]
    %v105 = vld [vmem:[#allocation7 + $0x30] sm:$0xf]
    %v106 = vld [vmem:[#allocation7 + $0x34] sm:$0xf]
    %v107 = vld [vmem:[#allocation7 + $0x38] sm:$0xf]
    %v108 = vld [vmem:[#allocation7 + $0x3c] sm:$0xf]
    %v109 = vld [vmem:[#allocation5] sm:$0xf]
    %v110 = vld [vmem:[#allocation8] sm:$0xf]
    %v111 = vld [vmem:[#allocation8 + $0x4] sm:$0xf]
    %v112 = vld [vmem:[#allocation8 + $0x8] sm:$0xf]
    %v113 = vld [vmem:[#allocation8 + $0xc] sm:$0xf]
    %v114 = vld [vmem:[#allocation8 + $0x10] sm:$0xf]
    %v115 = vld [vmem:[#allocation8 + $0x14] sm:$0xf]
    %v116 = vld [vmem:[#allocation8 + $0x18] sm:$0xf]
    %v117 = vld [vmem:[#allocation8 + $0x1c] sm:$0xf]
    %v118 = vld [vmem:[#allocation8 + $0x20] sm:$0xf]
    %v119 = vld [vmem:[#allocation8 + $0x24] sm:$0xf]
    %v120 = vld [vmem:[#allocation8 + $0x28] sm:$0xf]
    %v121 = vld [vmem:[#allocation8 + $0x2c] sm:$0xf]
    %v122 = vld [vmem:[#allocation8 + $0x30] sm:$0xf]
    %v123 = vld [vmem:[#allocation8 + $0x34] sm:$0xf]
    %v124 = vld [vmem:[#allocation8 + $0x38] sm:$0xf]
    %v125 = vld [vmem:[#allocation8 + $0x3c] sm:$0xf]
    %v142 = vunpack.c.l.b16 %v110
    %v143 = vunpack.c.l.b16 %v111
    %v144 = vunpack.c.l.b16 %v112
    %v145 = vunpack.c.l.b16 %v113
    %v146 = vunpack.c.l.b16 %v114
    %v147 = vunpack.c.l.b16 %v115
    %v148 = vunpack.c.l.b16 %v116
    %v149 = vunpack.c.l.b16 %v117
    %v150 = vunpack.c.l.b16 %v118
    %v151 = vunpack.c.l.b16 %v119
    %v152 = vunpack.c.l.b16 %v120
    %v153 = vunpack.c.l.b16 %v121
    %v154 = vunpack.c.l.b16 %v122
    %v155 = vunpack.c.l.b16 %v123
    %v156 = vunpack.c.l.b16 %v124
    %v157 = vunpack.c.l.b16 %v125
    %v158 = vpack.c.b16 %v143, %v142
    %v159 = vpack.c.b16 %v145, %v144
    %v160 = vpack.c.b16 %v147, %v146
    %v161 = vpack.c.b16 %v149, %v148
    %v162 = vpack.c.b16 %v151, %v150
    %v163 = vpack.c.b16 %v153, %v152
    %v164 = vpack.c.b16 %v155, %v154
    %v165 = vpack.c.b16 %v157, %v156
    %174 = vmatprep.subr.bf16.mxu0 0
    %175 = vmatpush1.bf16.msra.mxu0 %v165
    %176 = vmatprep.subr.bf16.mxu0 0
    %177 = vmatpush1.bf16.msra.mxu0 %v164
    %178 = vmatprep.subr.bf16.mxu0 0
    %179 = vmatpush1.bf16.msra.mxu0 %v163
    %180 = vmatprep.subr.bf16.mxu0 0
    %181 = vmatpush1.bf16.msra.mxu0 %v162
    %182 = vmatprep.subr.bf16.mxu0 0
    %183 = vmatpush1.bf16.msra.mxu0 %v161
    %184 = vmatprep.subr.bf16.mxu0 0
    %185 = vmatpush1.bf16.msra.mxu0 %v160
    %186 = vmatprep.subr.bf16.mxu0 0
    %187 = vmatpush1.bf16.msra.mxu0 %v159
    %188 = vmatprep.subr.bf16.mxu0 0
    %189 = vmatpush1.bf16.msra.mxu0 %v158
    %190 = vmatprep.subr.bf16.mxu0 0
    %191 = vmatpush2.bf16.msra.mxu0 0
    %192 = vmatprep.subr.bf16.mxu0 0
    %193 = vmatpush2.bf16.msra.mxu0 0
    %194 = vmatprep.subr.bf16.mxu0 0
    %195 = vmatpush2.bf16.msra.mxu0 0
    %196 = vmatprep.subr.bf16.mxu0 0
    %197 = vmatpush2.bf16.msra.mxu0 0
    %198 = vmatprep.subr.bf16.mxu0 0
    %199 = vmatpush2.bf16.msra.mxu0 0
    %200 = vmatprep.subr.bf16.mxu0 0
    %201 = vmatpush2.bf16.msra.mxu0 0
    %202 = vmatprep.subr.bf16.mxu0 0
    %203 = vmatpush2.bf16.msra.mxu0 0
    %204 = vmatprep.subr.bf16.mxu0 0
    %205 = vmatpush2.bf16.msra.mxu0 0
    %206 = vmatprep.mubr.bf16.mxu0 0
    %207 = vmatmul.mubr.bf16.gmra.mxu0 %v109
    %v208 = vpop.f32.mrf.mxu0
    %v209 = vadd.f32 0.0, %v208
    %v210 = vpop.f32.mrf.mxu0
    %v211 = vpop.f32.mrf.mxu0
    %v212 = vpop.f32.mrf.mxu0
    %213 = vdwg.mxu0
    %v230 = vunpack.c.l.b16 %v93
    %v231 = vunpack.c.l.b16 %v94
    %v232 = vunpack.c.l.b16 %v95
    %v233 = vunpack.c.l.b16 %v96
    %v234 = vunpack.c.l.b16 %v97
    %v235 = vunpack.c.l.b16 %v98
    %v236 = vunpack.c.l.b16 %v99
    %v237 = vunpack.c.l.b16 %v100
    %v238 = vunpack.c.l.b16 %v101
    %v239 = vunpack.c.l.b16 %v102
    %v240 = vunpack.c.l.b16 %v103
    %v241 = vunpack.c.l.b16 %v104
    %v242 = vunpack.c.l.b16 %v105
    %v243 = vunpack.c.l.b16 %v106
    %v244 = vunpack.c.l.b16 %v107
    %v245 = vunpack.c.l.b16 %v108
    %v246 = vpack.c.b16 %v231, %v230
    %v247 = vpack.c.b16 %v233, %v232
    %v248 = vpack.c.b16 %v235, %v234
    %v249 = vpack.c.b16 %v237, %v236
    %v250 = vpack.c.b16 %v239, %v238
    %v251 = vpack.c.b16 %v241, %v240
    %v252 = vpack.c.b16 %v243, %v242
    %v253 = vpack.c.b16 %v245, %v244
    %262 = vmatprep.subr.bf16.mxu0 0
    %263 = vmatpush1.bf16.msra.mxu0 %v253
    %264 = vmatprep.subr.bf16.mxu0 0
    %265 = vmatpush1.bf16.msra.mxu0 %v252
    %266 = vmatprep.subr.bf16.mxu0 0
    %267 = vmatpush1.bf16.msra.mxu0 %v251
    %268 = vmatprep.subr.bf16.mxu0 0
    %269 = vmatpush1.bf16.msra.mxu0 %v250
    %270 = vmatprep.subr.bf16.mxu0 0
    %271 = vmatpush1.bf16.msra.mxu0 %v249
    %272 = vmatprep.subr.bf16.mxu0 0
    %273 = vmatpush1.bf16.msra.mxu0 %v248
    %274 = vmatprep.subr.bf16.mxu0 0
    %275 = vmatpush1.bf16.msra.mxu0 %v247
    %276 = vmatprep.subr.bf16.mxu0 0
    %277 = vmatpush1.bf16.msra.mxu0 %v246
    %278 = vmatprep.subr.bf16.mxu0 0
    %279 = vmatpush2.bf16.msra.mxu0 0
    %280 = vmatprep.subr.bf16.mxu0 0
    %281 = vmatpush2.bf16.msra.mxu0 0
    %282 = vmatprep.subr.bf16.mxu0 0
    %283 = vmatpush2.bf16.msra.mxu0 0
    %284 = vmatprep.subr.bf16.mxu0 0
    %285 = vmatpush2.bf16.msra.mxu0 0
    %286 = vmatprep.subr.bf16.mxu0 0
    %287 = vmatpush2.bf16.msra.mxu0 0
    %288 = vmatprep.subr.bf16.mxu0 0
    %289 = vmatpush2.bf16.msra.mxu0 0
    %290 = vmatprep.subr.bf16.mxu0 0
    %291 = vmatpush2.bf16.msra.mxu0 0
    %292 = vmatprep.subr.bf16.mxu0 0
    %293 = vmatpush2.bf16.msra.mxu0 0
    %294 = vmatprep.mubr.bf16.mxu0 0
    %295 = vmatmul.mubr.bf16.gmra.mxu0 %v92
    %v296 = vpop.f32.mrf.mxu0
    %v297 = vadd.f32 %v209, %v296
    %v298 = vpop.f32.mrf.mxu0
    %v299 = vpop.f32.mrf.mxu0
    %v300 = vpop.f32.mrf.mxu0
    %301 = vdwg.mxu0
    %v302 = vld [vmem:[%s4] sm:$0x1]
    %v304 = vlaneseq
    %v305 = vshrl.u32 %v304, 7
    %v306 = vsub.s32 0, %v305
    %v307 = vrot.slane %v302, %v306
    %v309 = vadd.f32 %v297, %v307
    %vm310 = vcmp.gt.f32.partialorder %v309, 0.0
    %v311 = vmul.f32 %v309, 0.01
    %v312 = vsel %vm310, %v309, %v311
    %v313 = vpack.c.bf16 %v312, %v312
    %v314 = vld [vmem:[#allocation10] sm:$0xf]
    %v315 = vld [vmem:[#allocation10 + $0x4] sm:$0xf]
    %v316 = vld [vmem:[#allocation10 + $0x8] sm:$0xf]
    %v317 = vld [vmem:[#allocation10 + $0xc] sm:$0xf]
    %v318 = vld [vmem:[#allocation10 + $0x10] sm:$0xf]
    %v319 = vld [vmem:[#allocation10 + $0x14] sm:$0xf]
    %v320 = vld [vmem:[#allocation10 + $0x18] sm:$0xf]
    %v321 = vld [vmem:[#allocation10 + $0x1c] sm:$0xf]
    %v322 = vld [vmem:[#allocation10 + $0x20] sm:$0xf]
    %v323 = vld [vmem:[#allocation10 + $0x24] sm:$0xf]
    %v324 = vld [vmem:[#allocation10 + $0x28] sm:$0xf]
    %v325 = vld [vmem:[#allocation10 + $0x2c] sm:$0xf]
    %v326 = vld [vmem:[#allocation10 + $0x30] sm:$0xf]
    %v327 = vld [vmem:[#allocation10 + $0x34] sm:$0xf]
    %v328 = vld [vmem:[#allocation10 + $0x38] sm:$0xf]
    %v329 = vld [vmem:[#allocation10 + $0x3c] sm:$0xf]
    %v330 = vld [vmem:[%s6] sm:$0x1]
    %v332 = vlaneseq
    %v333 = vshrl.u32 %v332, 7
    %v334 = vsub.s32 0, %v333
    %v335 = vrot.slane %v330, %v334
    %v353 = vunpack.c.l.b16 %v314
    %v354 = vunpack.c.l.b16 %v315
    %v355 = vunpack.c.l.b16 %v316
    %v356 = vunpack.c.l.b16 %v317
    %v357 = vunpack.c.l.b16 %v318
    %v358 = vunpack.c.l.b16 %v319
    %v359 = vunpack.c.l.b16 %v320
    %v360 = vunpack.c.l.b16 %v321
    %v361 = vunpack.c.l.b16 %v322
    %v362 = vunpack.c.l.b16 %v323
    %v363 = vunpack.c.l.b16 %v324
    %v364 = vunpack.c.l.b16 %v325
    %v365 = vunpack.c.l.b16 %v326
    %v366 = vunpack.c.l.b16 %v327
    %v367 = vunpack.c.l.b16 %v328
    %v368 = vunpack.c.l.b16 %v329
    %v369 = vpack.c.b16 %v354, %v353
    %v370 = vpack.c.b16 %v356, %v355
    %v371 = vpack.c.b16 %v358, %v357
    %v372 = vpack.c.b16 %v360, %v359
    %v373 = vpack.c.b16 %v362, %v361
    %v374 = vpack.c.b16 %v364, %v363
    %v375 = vpack.c.b16 %v366, %v365
    %v376 = vpack.c.b16 %v368, %v367
    %385 = vmatprep.subr.bf16.mxu0 0
    %386 = vmatpush1.bf16.msra.mxu0 %v376
    %387 = vmatprep.subr.bf16.mxu0 0
    %388 = vmatpush1.bf16.msra.mxu0 %v375
    %389 = vmatprep.subr.bf16.mxu0 0
    %390 = vmatpush1.bf16.msra.mxu0 %v374
    %391 = vmatprep.subr.bf16.mxu0 0
    %392 = vmatpush1.bf16.msra.mxu0 %v373
    %393 = vmatprep.subr.bf16.mxu0 0
    %394 = vmatpush1.bf16.msra.mxu0 %v372
    %395 = vmatprep.subr.bf16.mxu0 0
    %396 = vmatpush1.bf16.msra.mxu0 %v371
    %397 = vmatprep.subr.bf16.mxu0 0
    %398 = vmatpush1.bf16.msra.mxu0 %v370
    %399 = vmatprep.subr.bf16.mxu0 0
    %400 = vmatpush1.bf16.msra.mxu0 %v369
    %401 = vmatprep.subr.bf16.mxu0 0
    %402 = vmatpush2.bf16.msra.mxu0 0
    %403 = vmatprep.subr.bf16.mxu0 0
    %404 = vmatpush2.bf16.msra.mxu0 0
    %405 = vmatprep.subr.bf16.mxu0 0
    %406 = vmatpush2.bf16.msra.mxu0 0
    %407 = vmatprep.subr.bf16.mxu0 0
    %408 = vmatpush2.bf16.msra.mxu0 0
    %409 = vmatprep.subr.bf16.mxu0 0
    %410 = vmatpush2.bf16.msra.mxu0 0
    %411 = vmatprep.subr.bf16.mxu0 0
    %412 = vmatpush2.bf16.msra.mxu0 0
    %413 = vmatprep.subr.bf16.mxu0 0
    %414 = vmatpush2.bf16.msra.mxu0 0
    %415 = vmatprep.subr.bf16.mxu0 0
    %416 = vmatpush2.bf16.msra.mxu0 0
    %417 = vmatprep.mubr.bf16.mxu0 0
    %418 = vmatmul.mubr.bf16.gmra.mxu0 %v313
    %v419 = vpop.f32.mrf.mxu0
    %v420 = vadd.f32 %v335, %v419
    %v421 = vpop.f32.mrf.mxu0
    %v422 = vpop.f32.mrf.mxu0
    %v423 = vpop.f32.mrf.mxu0
    %424 = vdwg.mxu0
    %425 = vst [vmem:[#allocation11] sm:$0xff] %v420
    // Predicated region
    $region50: #{tpu_custom_call.1} parent=1 // pred_check
      _
    $region51: #{tpu_custom_call.1} parent=1 // pred_check_branch
      %427 = sbr.rel (0) target = $region53
    $region52: #{tpu_custom_call.1} parent=1 // pred_region
      %s429 = ssub.s32 128, 128
      %430 = vsyncadd [#allocation4], %s429
      %s432 = sshll.u32 [#allocation11], 4
      %s433 = int_to_ptr.vmem [resolvable:$true] %s432
      %435 = dma.vmem_to_hbm [thread:$0]  %s433, 128, %s7, [#allocation4]
    $region53: #{tpu_custom_call.1} parent=1 // pred_fallthru
      _
    // Predicated region
    $region54: #{tpu_custom_call.1} parent=1 // pred_check
      _
    $region55: #{tpu_custom_call.1} parent=1 // pred_check_branch
      %437 = sbr.rel (0) target = $region57
    $region56: #{tpu_custom_call.1} parent=1 // pred_region
      %438 = dma.done [#allocation4], 128
    $region57: #{tpu_custom_call.1} parent=1 // pred_fallthru
      _
    %439 = vsyncpa [#allocation3], 1
    %440 = vsyncpa [#allocation6], 1
    %441 = vsyncpa [#allocation9], 1
    %442 = vsyncpa [#allocation4], 1

</llo_original>
